<compile_context>
chip_gen: v6e
topology: v6e:2x2x1
jax: 0.10.0
libtpu: 0.0.40
codegen_flags: <defaults>
</compile_context>

<pallas_src>
import jax
import jax.numpy as jnp
import numpy as np
from jax.experimental import pallas as pl
from jax.experimental.pallas import tpu as pltpu


def _vk_kernel(scal_ref, x_ref, noise_ref, w_ref, wt_ref, bias_ref, out_ref):
    # scal_ref: flattened (B*5,) f32 in SMEM; layout per batch b is
    #   [sigma, c_skip, c_in, inv_c_out, t] at offsets b*5 + {0..4}.
    b = pl.program_id(0)
    base = b * 5
    sigma = scal_ref[base + 0]
    c_skip = scal_ref[base + 1]
    c_in = scal_ref[base + 2]
    inv_c_out = scal_ref[base + 3]
    t = scal_ref[base + 4]

    # bf16 -> f32 upcast; all math done in f32.
    x = x_ref[...].astype(jnp.float32)          # (C, TILE)
    noise = noise_ref[...].astype(jnp.float32)  # (C, TILE)

    # x_noisy = x + sigmas_padded * noise ; network input scaling
    x_noisy = x + sigma * noise
    x_in = c_in * x_noisy

    # synthetic net: 1x1 conv over channels (matmul) + time bias + tanh.
    # At C=8 the MXU is far from full but harmless in this mem-bound regime.
    h = jnp.dot(w_ref[...], x_in, preferred_element_type=jnp.float32)
    tb = bias_ref[...] + t * wt_ref[...]        # (C, 1), folded once per tile
    x_pred = jnp.tanh(h + tb)

    # v-target (reciprocal of c_out hoisted to wrapper) and partial SSE,
    # reduced only over the C/sublane axis -> lane-dense (1, TILE) store.
    v_target = (x - c_skip * x_noisy) * inv_c_out
    diff = x_pred - v_target
    out_ref[...] = jnp.sum(diff * diff, axis=0, keepdims=True)


def vk_diffusion_loss(x, noise, sigmas, w, wt, bias, *, t_tile=2048):
    """VKDiffusion.forward: returns scalar MSE loss (same as F.mse_loss)."""
    B, C, T = x.shape
    t_tile = min(t_tile, T)
    assert T % t_tile == 0, "t_tile must divide T (tiles must not straddle a batch)"
    assert t_tile % 128 == 0 or t_tile == T
    num_t_tiles = T // t_tile

    # Stream the two dominant tensors as bf16 (no-op if already stored bf16).
    x_s = x.astype(jnp.bfloat16)
    n_s = noise.astype(jnp.bfloat16)

    # get_scale_weights + sigma_to_t: per-batch scalar glue in plain JAX,
    # packed into a tiny flat array for SMEM scalar prefetch.
    sigma_data = 1.0
    sigmas = sigmas.astype(jnp.float32)
    c_skip = sigma_data ** 2 / (sigmas ** 2 + sigma_data ** 2)
    c_out = -sigmas * sigma_data * (sigma_data ** 2 + sigmas ** 2) ** (-0.5)
    c_in = (sigmas ** 2 + sigma_data ** 2) ** (-0.5)
    inv_c_out = 1.0 / (c_out + 1e-7)
    t = jnp.arctan(sigmas) / jnp.pi * 2.0
    scal = jnp.stack([sigmas, c_skip, c_in, inv_c_out, t], axis=1)  # (B, 5)
    scal = scal.reshape(-1).astype(jnp.float32)                     # (B*5,)

    grid_spec = pltpu.PrefetchScalarGridSpec(
        num_scalar_prefetch=1,
        grid=(B, num_t_tiles),
        in_specs=[
            pl.BlockSpec((None, C, t_tile), lambda b, i, scal: (b, 0, i)),  # x
            pl.BlockSpec((None, C, t_tile), lambda b, i, scal: (b, 0, i)),  # noise
            pl.BlockSpec((C, C), lambda b, i, scal: (0, 0)),                # net weight
            pl.BlockSpec((C, 1), lambda b, i, scal: (0, 0)),                # time proj
            pl.BlockSpec((C, 1), lambda b, i, scal: (0, 0)),                # bias
        ],
        out_specs=pl.BlockSpec((None, 1, t_tile), lambda b, i, scal: (b, 0, i)),
    )

    partials = pl.pallas_call(
        _vk_kernel,
        out_shape=jax.ShapeDtypeStruct((B, 1, T), jnp.float32),
        grid_spec=grid_spec,
        compiler_params=pltpu.CompilerParams(
            dimension_semantics=("parallel", "parallel")),
    )(scal, x_s, n_s, w, wt, bias)

    return jnp.sum(partials) / (B * C * T)


def vk_diffusion_loss_ref(x, noise, sigmas, w, wt, bias):
    """Pure-JAX reference mirroring the PyTorch module semantics."""
    s = sigmas[:, None, None]
    sigma_data = 1.0
    x_noisy = x + s * noise
    c_skip = sigma_data ** 2 / (s ** 2 + sigma_data ** 2)
    c_out = -s * sigma_data * (sigma_data ** 2 + s ** 2) ** (-0.5)
    c_in = (s ** 2 + sigma_data ** 2) ** (-0.5)
    t = jnp.arctan(sigmas) / jnp.pi * 2.0
    x_in = c_in * x_noisy
    h = jnp.einsum('oc,bct->bot', w, x_in) + bias[None] + t[:, None, None] * wt[None]
    x_pred = jnp.tanh(h)
    v_target = (x - c_skip * x_noisy) / (c_out + 1e-7)
    return jnp.mean((x_pred - v_target) ** 2)


if __name__ == "__main__":
    B, C, T = 2, 8, 128

    key = jax.random.PRNGKey(0)
    kx, kn, ks, kw, kwt, kb = jax.random.split(key, 6)

    # Inputs are "stored" in bf16 (what the kernel streams); the reference
    # consumes the identical values upcast to f32 so the comparison is tight.
    x = jax.random.normal(kx, (B, C, T), dtype=jnp.float32).astype(jnp.bfloat16)
    noise = jax.random.normal(kn, (B, C, T), dtype=jnp.float32).astype(jnp.bfloat16)
    # sigma_distribution: deterministic uniform draw in [0.1, 2.0)
    sigmas = jax.random.uniform(ks, (B,), dtype=jnp.float32,
                                minval=0.1, maxval=2.0)

    # synthetic, deterministic net parameters
    w = jax.random.normal(kw, (C, C), dtype=jnp.float32) * 0.3
    wt = jax.random.normal(kwt, (C, 1), dtype=jnp.float32) * 0.3
    bias = jax.random.normal(kb, (C, 1), dtype=jnp.float32) * 0.1

    loss = jax.block_until_ready(vk_diffusion_loss(x, noise, sigmas, w, wt, bias))
    loss_ref = jax.block_until_ready(
        vk_diffusion_loss_ref(x.astype(jnp.float32), noise.astype(jnp.float32),
                              sigmas, w, wt, bias))

    np.testing.assert_allclose(np.asarray(loss), np.asarray(loss_ref),
                               rtol=2e-3, atol=2e-4)
    print("KERNEL_OK")
</pallas_src>

<mosaic_0001>
module attributes {stable_mosaic.version = 11 : i64} {
  func.func @_vk_kernel(%arg0: i32, %arg1: i32, %arg2: memref<10xf32, #tpu.memory_space<smem>>, %arg3: memref<1x8x128xbf16, #tpu.memory_space<vmem>>, %arg4: memref<1x8x128xbf16, #tpu.memory_space<vmem>>, %arg5: memref<8x8xf32, #tpu.memory_space<vmem>>, %arg6: memref<8x1xf32, #tpu.memory_space<vmem>>, %arg7: memref<8x1xf32, #tpu.memory_space<vmem>>, %arg8: memref<1x1x128xf32, #tpu.memory_space<vmem>>) attributes {dimension_semantics = [#tpu.dimension_semantics<parallel>, #tpu.dimension_semantics<parallel>], iteration_bounds = array<i64: 2, 1>, scalar_prefetch = 1 : i64, scratch_operands = 0 : i64, tpu.core_type = #tpu.core_type<tc>, window_params = [{transform_indices = @transform_0, window_bounds = array<i64: 1, 8, 128>}, {transform_indices = @transform_1, window_bounds = array<i64: 1, 8, 128>}, {pipeline_mode = #tpu.pipeline_mode<synchronous>, transform_indices = @transform_2, window_bounds = array<i64: 8, 8>}, {pipeline_mode = #tpu.pipeline_mode<synchronous>, transform_indices = @transform_3, window_bounds = array<i64: 8, 1>}, {pipeline_mode = #tpu.pipeline_mode<synchronous>, transform_indices = @transform_4, window_bounds = array<i64: 8, 1>}, {transform_indices = @transform_5, window_bounds = array<i64: 1, 1, 128>}]} {
    %c5_i32 = arith.constant 5 : i32
    %0 = arith.muli %arg0, %c5_i32 : i32
    %c0_i32 = arith.constant 0 : i32
    %1 = arith.addi %0, %c0_i32 : i32
    %2 = arith.index_cast %1 : i32 to index
    %3 = memref.load %arg2[%2] : memref<10xf32, #tpu.memory_space<smem>>
    %c1_i32 = arith.constant 1 : i32
    %4 = arith.addi %0, %c1_i32 : i32
    %5 = arith.index_cast %4 : i32 to index
    %6 = memref.load %arg2[%5] : memref<10xf32, #tpu.memory_space<smem>>
    %c2_i32 = arith.constant 2 : i32
    %7 = arith.addi %0, %c2_i32 : i32
    %8 = arith.index_cast %7 : i32 to index
    %9 = memref.load %arg2[%8] : memref<10xf32, #tpu.memory_space<smem>>
    %c3_i32 = arith.constant 3 : i32
    %10 = arith.addi %0, %c3_i32 : i32
    %11 = arith.index_cast %10 : i32 to index
    %12 = memref.load %arg2[%11] : memref<10xf32, #tpu.memory_space<smem>>
    %c4_i32 = arith.constant 4 : i32
    %13 = arith.addi %0, %c4_i32 : i32
    %14 = arith.index_cast %13 : i32 to index
    %15 = memref.load %arg2[%14] : memref<10xf32, #tpu.memory_space<smem>>
    %c0 = arith.constant 0 : index
    %c0_0 = arith.constant 0 : index
    %c0_1 = arith.constant 0 : index
    %16 = vector.load %arg3[%c0, %c0_0, %c0_1] : memref<1x8x128xbf16, #tpu.memory_space<vmem>>, vector<1x8x128xbf16>
    %17 = vector.shape_cast %16 : vector<1x8x128xbf16> to vector<8x128xbf16>
    %18 = arith.extf %17 : vector<8x128xbf16> to vector<8x128xf32>
    %c0_2 = arith.constant 0 : index
    %c0_3 = arith.constant 0 : index
    %c0_4 = arith.constant 0 : index
    %19 = vector.load %arg4[%c0_2, %c0_3, %c0_4] : memref<1x8x128xbf16, #tpu.memory_space<vmem>>, vector<1x8x128xbf16>
    %20 = vector.shape_cast %19 : vector<1x8x128xbf16> to vector<8x128xbf16>
    %21 = arith.extf %20 : vector<8x128xbf16> to vector<8x128xf32>
    %22 = vector.broadcast %3 : f32 to vector<8x128xf32>
    %23 = arith.mulf %22, %21 : vector<8x128xf32>
    %24 = arith.addf %18, %23 : vector<8x128xf32>
    %25 = vector.broadcast %9 : f32 to vector<8x128xf32>
    %26 = arith.mulf %25, %24 : vector<8x128xf32>
    %c0_5 = arith.constant 0 : index
    %c0_6 = arith.constant 0 : index
    %27 = vector.load %arg5[%c0_5, %c0_6] : memref<8x8xf32, #tpu.memory_space<vmem>>, vector<8x8xf32>
    %cst = arith.constant dense<0.000000e+00> : vector<8x128xf32>
    %28 = tpu.matmul %27, %26, %cst {dimension_numbers = #tpu.dot_dimension_numbers<[1], [0], [0], [1], [0, 0, 1, 1], [], []>} : vector<8x8xf32>, vector<8x128xf32>, vector<8x128xf32> -> vector<8x128xf32>
    %c0_7 = arith.constant 0 : index
    %c0_8 = arith.constant 0 : index
    %29 = vector.load %arg7[%c0_7, %c0_8] : memref<8x1xf32, #tpu.memory_space<vmem>>, vector<8x1xf32>
    %c0_9 = arith.constant 0 : index
    %c0_10 = arith.constant 0 : index
    %30 = vector.load %arg6[%c0_9, %c0_10] : memref<8x1xf32, #tpu.memory_space<vmem>>, vector<8x1xf32>
    %31 = vector.broadcast %15 : f32 to vector<8x1xf32>
    %32 = arith.mulf %31, %30 : vector<8x1xf32>
    %33 = arith.addf %29, %32 : vector<8x1xf32>
    %34 = vector.broadcast %33 : vector<8x1xf32> to vector<8x128xf32>
    %35 = arith.addf %28, %34 : vector<8x128xf32>
    %36 = math.tanh %35 : vector<8x128xf32>
    %37 = vector.broadcast %6 : f32 to vector<8x128xf32>
    %38 = arith.mulf %37, %24 : vector<8x128xf32>
    %39 = arith.subf %18, %38 : vector<8x128xf32>
    %40 = vector.broadcast %12 : f32 to vector<8x128xf32>
    %41 = arith.mulf %39, %40 : vector<8x128xf32>
    %42 = arith.subf %36, %41 : vector<8x128xf32>
    %43 = arith.mulf %42, %42 : vector<8x128xf32>
    %cst_11 = arith.constant dense<0.000000e+00> : vector<128xf32>
    %44 = vector.multi_reduction <add>, %43, %cst_11 [0] : vector<8x128xf32> to vector<128xf32>
    %45 = vector.shape_cast %44 : vector<128xf32> to vector<1x128xf32>
    %c0_12 = arith.constant 0 : index
    %c0_13 = arith.constant 0 : index
    %c0_14 = arith.constant 0 : index
    %46 = vector.load %arg8[%c0_12, %c0_13, %c0_14] : memref<1x1x128xf32, #tpu.memory_space<vmem>>, vector<1x1x128xf32>
    %47 = vector.shape_cast %46 : vector<1x1x128xf32> to vector<1x128xf32>
    %48 = vector.shape_cast %45 : vector<1x128xf32> to vector<1x1x128xf32>
    tpu.vector_store %arg8[%c0_12, %c0_13, %c0_14], %48 {strides = array<i32>} : memref<1x1x128xf32, #tpu.memory_space<vmem>>, vector<1x1x128xf32>,
    return
  }
  func.func @transform_0(%arg0: i32, %arg1: i32, %arg2: memref<10xf32, #tpu.memory_space<smem>>) -> (i32, i32, i32) {
    %c0_i32 = arith.constant 0 : i32
    %c0_i32_0 = arith.constant 0 : i32
    return %arg0, %c0_i32, %arg1 : i32, i32, i32
  }
  func.func @transform_1(%arg0: i32, %arg1: i32, %arg2: memref<10xf32, #tpu.memory_space<smem>>) -> (i32, i32, i32) {
    %c0_i32 = arith.constant 0 : i32
    %c0_i32_0 = arith.constant 0 : i32
    return %arg0, %c0_i32, %arg1 : i32, i32, i32
  }
  func.func @transform_2(%arg0: i32, %arg1: i32, %arg2: memref<10xf32, #tpu.memory_space<smem>>) -> (i32, i32) {
    %c0_i32 = arith.constant 0 : i32
    %c0_i32_0 = arith.constant 0 : i32
    %c0_i32_1 = arith.constant 0 : i32
    return %c0_i32, %c0_i32_0 : i32, i32
  }
  func.func @transform_3(%arg0: i32, %arg1: i32, %arg2: memref<10xf32, #tpu.memory_space<smem>>) -> (i32, i32) {
    %c0_i32 = arith.constant 0 : i32
    %c0_i32_0 = arith.constant 0 : i32
    %c0_i32_1 = arith.constant 0 : i32
    return %c0_i32, %c0_i32_0 : i32, i32
  }
  func.func @transform_4(%arg0: i32, %arg1: i32, %arg2: memref<10xf32, #tpu.memory_space<smem>>) -> (i32, i32) {
    %c0_i32 = arith.constant 0 : i32
    %c0_i32_0 = arith.constant 0 : i32
    %c0_i32_1 = arith.constant 0 : i32
    return %c0_i32, %c0_i32_0 : i32, i32
  }
  func.func @transform_5(%arg0: i32, %arg1: i32, %arg2: memref<10xf32, #tpu.memory_space<smem>>) -> (i32, i32, i32) {
    %c0_i32 = arith.constant 0 : i32
    %c0_i32_0 = arith.constant 0 : i32
    return %arg0, %c0_i32, %arg1 : i32, i32, i32
  }
}

</mosaic_0001>

<llo_original>
// kernel: tpu_custom_call.1
$region0: #{tpu_custom_call.1}
  #allocation0 [shape = 'u32[]', space=smem, size = 0x4, offset = 0x4, fixed_abs, tag = 'smem constant byte address 0x4 - core index']
  #allocation1 [shape = 'u32[144,128]{1,0:T(1,128)}', space=vmem, size = 0x12000, scoped, tag = 'internal scratch']
  #allocation2 [shape = 's32[1]{0}', space=sflag, size = 0x4, scoped, tag = 'scoped memory for tpu_custom_call.1']
  #allocation3 [shape = 'u8[512]{0}', space=smem, size = 0x200, scoped, tag = 'prefetched SMEM operand 0']
  %s0 = inlined_call_operand.vmem [shape: f32[10], index: 0, kind: input, shape index: {}]
  %s1 = inlined_call_operand.vmem [shape: bf16[2,8,128], index: 1, kind: input, shape index: {}]
  %s2 = inlined_call_operand.vmem [shape: bf16[2,8,128], index: 2, kind: input, shape index: {}]
  %s3 = inlined_call_operand.hbm [shape: f32[8,8], index: 3, kind: input, shape index: {}]
  %s4 = inlined_call_operand.vmem [shape: f32[8,1], index: 4, kind: input, shape index: {}]
  %s5 = inlined_call_operand.vmem [shape: f32[8,1], index: 5, kind: input, shape index: {}]
  %s6 = inlined_call_operand.hbm [shape: f32[2,1,128], index: 6, kind: output, shape index: {}]
  %s7 = sld [smem:[#allocation0]]
  $region57: #{tpu_custom_call.1} parent=0
    _
  %s9 = ssub.s32 1, %s7
  %s10 = scalar_select 0, %s9, %s7
  %s11 = sshll.u32 %s0, 4
  %s12 = int_to_ptr.vmem [resolvable:$true] %s11
  %14 = dma.vmem_to_smem %s12, 16, [#allocation3], [#allocation2]
  %15 = dma.done [#allocation2], 16
  %16 = sfence
  $region1: #{tpu_custom_call.1} parent=0
    #allocation4 [shape = 'u8[4096]{0}', space=vmem, size = 0x1000, scoped, tag = 'input window, operand 3, single buffered']
    #allocation5 [shape = 's32[2]{0}', space=sflag, size = 0x8, scoped, tag = 'scoped memory for tpu_custom_call.1']
    #allocation6 [shape = 's32[2]{0}', space=sflag, size = 0x8, scoped, tag = 'scoped memory for tpu_custom_call.1']
    #allocation7 [shape = 'u8[1024]{0}', space=vmem, size = 0x400, scoped, tag = 'output window, operand 0']
    %17 = vsyncpa [#allocation5], 0
    %18 = vsyncpa [#allocation6], 0
    %s19 = scalar_lea.sflag [#allocation6], 1
    %20 = vsyncpa %s19, 0
    loop: start=0, step=1, limit=4
    $region2: #{tpu_custom_call.1} parent=1 // loop_pre_header
      _
    $region3: #{tpu_custom_call.1} parent=1 // loop_header
      %s22 = sphi 0, %s26
      %p23 = scmp.ge.s32.totalorder %s22, 4
      %s29 = sphi 0, %s41
      %s30 = sphi 0, %s37
      %s31 = sphi 0, %s29
      %s32 = sphi 0, %s30
      %s33 = sphi 0, %s31
      %s34 = sphi 0, %s32
      %s46 = sphi 0, %s48
      %s49 = sphi 0, %s46
      %s50 = sphi 0, %s49
      %s66 = sphi 0, %s50
      %s74 = sphi 0, %s76
      %s77 = sphi 0, %s74
      %s78 = sphi 0, %s77
      %s94 = sphi 0, %s78
      %s98 = sphi 0, %s98
      %s100 = sphi 0, %s98
      %s101 = sphi 0, %s100
      %s115 = sphi 0, %s101
      %s119 = sphi 0, %s119
      %s121 = sphi 0, %s119
      %s122 = sphi 0, %s121
      %s136 = sphi 0, %s122
      %s140 = sphi 0, %s140
      %s142 = sphi 0, %s140
      %s143 = sphi 0, %s142
      %s157 = sphi 0, %s143
      %s165 = sphi 0, %s167
      %s168 = sphi 0, %s165
      %s169 = sphi 0, %s168
      %s185 = sphi 0, %s169
    $region4: #{tpu_custom_call.1} parent=1 // loop_header_branch
      %25 = sbr.rel (%p23) target = $region8
    $region5: #{tpu_custom_call.1} parent=1 // loop_body
      %s27 = ssub.s32 %s22, 1
      %s28 = ssub.s32 %s22, 2
      %s35 = sadd.s32 1, %s30
      %p36 = scmp.ge.s32.totalorder %s35, 1
      %s37 = scalar_select %p36, 0, %s35
      %s38 = sadd.s32 1, %s29
      %s39 = scalar_select %p36, %s38, %s29
      %p40 = scmp.ge.s32.totalorder %s39, 2
      %s41 = scalar_select %p40, 0, %s39
      %s42 = ssub.s32 %s29, %s41
      %s43 = ssub.s32 %s30, %s37
      %s44 = sor.u32 %s42, %s43
      %p45 = scmp.eq.s32.totalorder %s44, 0
      %s47 = sadd.s32 %s46, 1
      %s48 = scalar_select %p45, %s46, %s47
      %p51 = pneg %p45
      %p52 = scmp.eq.s32.totalorder %s22, 1
      %p53 = por %p51, %p52
      %p54 = scmp.ne.s32.totalorder %s46, %s49
      %p55 = scmp.eq.s32.totalorder %s22, 0
      %p56 = por %p54, %p55
      %p57 = scmp.ne.s32.totalorder %s46, %s49
      %p58 = scmp.eq.s32.totalorder %s27, 1
      %p59 = por %p57, %p58
      %p60 = scmp.ne.s32.totalorder %s49, %s50
      %p61 = scmp.eq.s32.totalorder %s27, 0
      %p62 = por %p60, %p61
      %p63 = scmp.ne.s32.totalorder %s49, %s50
      %p64 = scmp.eq.s32.totalorder %s28, 1
      %p65 = por %p63, %p64
      %p67 = scmp.ne.s32.totalorder %s50, %s66
      %p68 = scmp.eq.s32.totalorder %s28, 0
      %p69 = por %p67, %p68
      %s70 = ssub.s32 %s29, %s41
      %s71 = ssub.s32 %s30, %s37
      %s72 = sor.u32 %s70, %s71
      %p73 = scmp.eq.s32.totalorder %s72, 0
      %s75 = sadd.s32 %s74, 1
      %s76 = scalar_select %p73, %s74, %s75
      %p79 = pneg %p73
      %p80 = scmp.eq.s32.totalorder %s22, 1
      %p81 = por %p79, %p80
      %p82 = scmp.ne.s32.totalorder %s74, %s77
      %p83 = scmp.eq.s32.totalorder %s22, 0
      %p84 = por %p82, %p83
      %p85 = scmp.ne.s32.totalorder %s74, %s77
      %p86 = scmp.eq.s32.totalorder %s27, 1
      %p87 = por %p85, %p86
      %p88 = scmp.ne.s32.totalorder %s77, %s78
      %p89 = scmp.eq.s32.totalorder %s27, 0
      %p90 = por %p88, %p89
      %p91 = scmp.ne.s32.totalorder %s77, %s78
      %p92 = scmp.eq.s32.totalorder %s28, 1
      %p93 = por %p91, %p92
      %p95 = scmp.ne.s32.totalorder %s78, %s94
      %p96 = scmp.eq.s32.totalorder %s28, 0
      %p97 = por %p95, %p96
      %s99 = sadd.s32 %s98, 1
      %p102 = scmp.eq.s32.totalorder %s22, 1
      %p103 = scmp.ne.s32.totalorder %s98, %s100
      %p104 = scmp.eq.s32.totalorder %s22, 0
      %p105 = por %p103, %p104
      %p106 = scmp.ne.s32.totalorder %s98, %s100
      %p107 = scmp.eq.s32.totalorder %s27, 1
      %p108 = por %p106, %p107
      %p109 = scmp.ne.s32.totalorder %s100, %s101
      %p110 = scmp.eq.s32.totalorder %s27, 0
      %p111 = por %p109, %p110
      %p112 = scmp.ne.s32.totalorder %s100, %s101
      %p113 = scmp.eq.s32.totalorder %s28, 1
      %p114 = por %p112, %p113
      %p116 = scmp.ne.s32.totalorder %s101, %s115
      %p117 = scmp.eq.s32.totalorder %s28, 0
      %p118 = por %p116, %p117
      %s120 = sadd.s32 %s119, 1
      %p123 = scmp.eq.s32.totalorder %s22, 1
      %p124 = scmp.ne.s32.totalorder %s119, %s121
      %p125 = scmp.eq.s32.totalorder %s22, 0
      %p126 = por %p124, %p125
      %p127 = scmp.ne.s32.totalorder %s119, %s121
      %p128 = scmp.eq.s32.totalorder %s27, 1
      %p129 = por %p127, %p128
      %p130 = scmp.ne.s32.totalorder %s121, %s122
      %p131 = scmp.eq.s32.totalorder %s27, 0
      %p132 = por %p130, %p131
      %p133 = scmp.ne.s32.totalorder %s121, %s122
      %p134 = scmp.eq.s32.totalorder %s28, 1
      %p135 = por %p133, %p134
      %p137 = scmp.ne.s32.totalorder %s122, %s136
      %p138 = scmp.eq.s32.totalorder %s28, 0
      %p139 = por %p137, %p138
      %s141 = sadd.s32 %s140, 1
      %p144 = scmp.eq.s32.totalorder %s22, 1
      %p145 = scmp.ne.s32.totalorder %s140, %s142
      %p146 = scmp.eq.s32.totalorder %s22, 0
      %p147 = por %p145, %p146
      %p148 = scmp.ne.s32.totalorder %s140, %s142
      %p149 = scmp.eq.s32.totalorder %s27, 1
      %p150 = por %p148, %p149
      %p151 = scmp.ne.s32.totalorder %s142, %s143
      %p152 = scmp.eq.s32.totalorder %s27, 0
      %p153 = por %p151, %p152
      %p154 = scmp.ne.s32.totalorder %s142, %s143
      %p155 = scmp.eq.s32.totalorder %s28, 1
      %p156 = por %p154, %p155
      %p158 = scmp.ne.s32.totalorder %s143, %s157
      %p159 = scmp.eq.s32.totalorder %s28, 0
      %p160 = por %p158, %p159
      %s161 = ssub.s32 %s29, %s41
      %s162 = ssub.s32 %s30, %s37
      %s163 = sor.u32 %s161, %s162
      %p164 = scmp.eq.s32.totalorder %s163, 0
      %s166 = sadd.s32 %s165, 1
      %s167 = scalar_select %p164, %s165, %s166
      %p170 = pneg %p164
      %p171 = scmp.eq.s32.totalorder %s22, 1
      %p172 = por %p170, %p171
      %p173 = scmp.ne.s32.totalorder %s165, %s168
      %p174 = scmp.eq.s32.totalorder %s22, 0
      %p175 = por %p173, %p174
      %p176 = scmp.ne.s32.totalorder %s165, %s168
      %p177 = scmp.eq.s32.totalorder %s27, 1
      %p178 = por %p176, %p177
      %p179 = scmp.ne.s32.totalorder %s168, %s169
      %p180 = scmp.eq.s32.totalorder %s27, 0
      %p181 = por %p179, %p180
      %p182 = scmp.ne.s32.totalorder %s168, %s169
      %p183 = scmp.eq.s32.totalorder %s28, 1
      %p184 = por %p182, %p183
      %p186 = scmp.ne.s32.totalorder %s169, %s185
      %p187 = scmp.eq.s32.totalorder %s28, 0
      %p188 = por %p186, %p187
      %p189 = scmp.le.s32.totalorder 1, %s22
      %p190 = scmp.lt.s32.totalorder %s22, 3
      %p191 = pnand %p189, %p190
      %p192 = pneg %p191
      // Predicated region
      $region9: #{tpu_custom_call.1} parent=5 // pred_check
        _
      $region10: #{tpu_custom_call.1} parent=5 // pred_check_branch
        %194 = sbr.rel (%p191) target = $region12
      $region11: #{tpu_custom_call.1} parent=5 // pred_region
        %s195 = ssub.s32 %s22, 1
        // Predicated region
        $region13: #{tpu_custom_call.1} parent=11 // pred_check
          %p196 = pneg %p111
        $region14: #{tpu_custom_call.1} parent=11 // pred_check_branch
          %198 = sbr.rel (%p196) target = $region16
        $region15: #{tpu_custom_call.1} parent=11 // pred_region
          %s200 = ssub.s32 128, 128
          %201 = vsyncadd [#allocation5], %s200
          %s203 = sshll.u32 [#allocation4], 4
          %s204 = int_to_ptr.vmem [resolvable:$true] %s203
          %206 = dma.hbm_to_vmem [thread:$0]  %s3, 128, %s204, [#allocation5]
        $region16: #{tpu_custom_call.1} parent=11 // pred_fallthru
          _
        // Predicated region
        $region17: #{tpu_custom_call.1} parent=11 // pred_check
          %p207 = pneg %p132
        $region18: #{tpu_custom_call.1} parent=11 // pred_check_branch
          %209 = sbr.rel (%p207) target = $region20
        $region19: #{tpu_custom_call.1} parent=11 // pred_region
          _
        $region20: #{tpu_custom_call.1} parent=11 // pred_fallthru
          _
        // Predicated region
        $region21: #{tpu_custom_call.1} parent=11 // pred_check
          %p210 = pneg %p153
        $region22: #{tpu_custom_call.1} parent=11 // pred_check_branch
          %212 = sbr.rel (%p210) target = $region24
        $region23: #{tpu_custom_call.1} parent=11 // pred_region
          _
        $region24: #{tpu_custom_call.1} parent=11 // pred_fallthru
          _
      $region12: #{tpu_custom_call.1} parent=5 // pred_fallthru
        _
      %p213 = scmp.lt.s32.totalorder %s22, 2
      // Predicated region
      $region25: #{tpu_custom_call.1} parent=5 // pred_check
        %p214 = pneg %p213
      $region26: #{tpu_custom_call.1} parent=5 // pred_check_branch
        %216 = sbr.rel (%p214) target = $region28
      $region27: #{tpu_custom_call.1} parent=5 // pred_region
        // Predicated region
        $region29: #{tpu_custom_call.1} parent=27 // pred_check
          %p217 = pneg %p56
        $region30: #{tpu_custom_call.1} parent=27 // pred_check_branch
          %219 = sbr.rel (%p217) target = $region32
        $region31: #{tpu_custom_call.1} parent=27 // pred_region
          %p220 = scmp.lt.s32.totalorder %s29, 1
          %s221 = scalar_select %p220, %s29, 1
          %p222 = scmp.lt.s32.totalorder %s30, 0
          %s223 = scalar_select %p222, %s30, 0
          %s224 = sadd.s32 %s223, %s221
          %s225 = smul.addr %s224, 4
          %s226 = scalar_lea.vmem %s1, %s225
        $region32: #{tpu_custom_call.1} parent=27 // pred_fallthru
          _
        // Predicated region
        $region33: #{tpu_custom_call.1} parent=27 // pred_check
          %p227 = pneg %p84
        $region34: #{tpu_custom_call.1} parent=27 // pred_check_branch
          %229 = sbr.rel (%p227) target = $region36
        $region35: #{tpu_custom_call.1} parent=27 // pred_region
          %p230 = scmp.lt.s32.totalorder %s29, 1
          %s231 = scalar_select %p230, %s29, 1
          %p232 = scmp.lt.s32.totalorder %s30, 0
          %s233 = scalar_select %p232, %s30, 0
          %s234 = sadd.s32 %s233, %s231
          %s235 = smul.addr %s234, 4
          %s236 = scalar_lea.vmem %s2, %s235
        $region36: #{tpu_custom_call.1} parent=27 // pred_fallthru
          _
      $region28: #{tpu_custom_call.1} parent=5 // pred_fallthru
        _
      %p237 = scmp.le.s32.totalorder 1, %s22
      %p238 = scmp.lt.s32.totalorder %s22, 3
      %p239 = pnand %p237, %p238
      %p240 = pneg %p239
      // Predicated region
      $region37: #{tpu_custom_call.1} parent=5 // pred_check
        _
      $region38: #{tpu_custom_call.1} parent=5 // pred_check_branch
        %242 = sbr.rel (%p239) target = $region40
      $region39: #{tpu_custom_call.1} parent=5 // pred_region
        %s243 = ssub.s32 %s22, 1
        // Predicated region
        $region41: #{tpu_custom_call.1} parent=39 // pred_check
          %p244 = pneg %p111
        $region42: #{tpu_custom_call.1} parent=39 // pred_check_branch
          %246 = sbr.rel (%p244) target = $region44
        $region43: #{tpu_custom_call.1} parent=39 // pred_region
          %247 = dma.done [#allocation5], 128
        $region44: #{tpu_custom_call.1} parent=39 // pred_fallthru
          _
        %p248 = scmp.lt.s32.totalorder %s31, 1
        %s249 = scalar_select %p248, %s31, 1
        %p250 = scmp.lt.s32.totalorder %s32, 0
        %s251 = scalar_select %p250, %s32, 0
        %s252 = sadd.s32 %s251, %s249
        %s253 = smul.addr %s252, 4
        %s254 = scalar_lea.vmem %s1, %s253
        %p255 = pneg %p62
        %p256 = pneg %p59
        %p257 = scmp.lt.s32.totalorder %s31, 1
        %s258 = scalar_select %p257, %s31, 1
        %p259 = scmp.lt.s32.totalorder %s32, 0
        %s260 = scalar_select %p259, %s32, 0
        %s261 = sadd.s32 %s260, %s258
        %s262 = smul.addr %s261, 4
        %s263 = scalar_lea.vmem %s2, %s262
        %p264 = pneg %p90
        %p265 = pneg %p87
        %p266 = pneg %p111
        %p267 = pneg %p108
        %p268 = pneg %p132
        %p269 = pneg %p129
        %p270 = pneg %p153
        %p271 = pneg %p150
        %p272 = pneg %p181
        %p273 = pneg %p178
        %s274 = sand.u32 %s168, 1
        %s275 = scalar_lea.sflag [#allocation6], %s274
        %s276 = sand.u32 %s168, 1
        %s277 = scalar_lea.vmem [#allocation7], %s276
        %p278 = scmp.lt.s32.totalorder %s31, 1
        %s279 = scalar_select %p278, %s31, 1
        %p280 = scmp.lt.s32.totalorder %s32, 0
        %s281 = scalar_select %p280, %s32, 0
        %s282 = sadd.s32 %s281, %s279
        %s283 = smul.addr %s282, 4
        %s284 = scalar_lea.vmem %s1, %s283
        %p285 = scmp.lt.s32.totalorder %s31, 1
        %s286 = scalar_select %p285, %s31, 1
        %p287 = scmp.lt.s32.totalorder %s32, 0
        %s288 = scalar_select %p287, %s32, 0
        %s289 = sadd.s32 %s288, %s286
        %s290 = smul.addr %s289, 4
        %s291 = scalar_lea.vmem %s2, %s290
        %s292 = smul.u32 %s31, 5
        %s293 = sld [smem:[#allocation3 + %s292]]
        %s294 = sadd.s32 %s292, 1
        %s295 = sld [smem:[#allocation3 + %s294]]
        %s296 = sadd.s32 %s292, 2
        %s297 = sld [smem:[#allocation3 + %s296]]
        %s298 = sadd.s32 %s292, 3
        %s299 = sld [smem:[#allocation3 + %s298]]
        %s300 = sadd.s32 %s292, 4
        %s301 = sld [smem:[#allocation3 + %s300]]
        %v302 = vld [vmem:[%s284] sm:$0xf]
        %v303 = vunpack.c.l.bf16 %v302
        %v304 = vld [vmem:[%s291] sm:$0xf]
        %v305 = vunpack.c.l.bf16 %v304
        %v306 = vstv %s293
        %v307 = vmul.f32 %v306, %v305
        %v308 = vadd.f32 %v303, %v307
        %v309 = vstv %s297
        %v310 = vmul.f32 %v309, %v308
        %v311 = vld [vmem:[#allocation4] sm:$0xff]
        %v312 = vld [vmem:[%s5] sm:$0xff]
        %v313 = vld [vmem:[%s4] sm:$0xff]
        %v314 = vstv %s301
        %v315 = vmul.f32 %v314, %v313
        %v316 = vadd.f32 %v312, %v315
        %318 = vset.pattern.permute.xlu0 0
        %319 = vperm.xlu0 %318, %v316
        %v320 = vpop.permute.xlu0 %319
        %vm322 = vcmask 64512
        %v324 = vsel %vm322, %v311, 0
        %326 = vmatprep.subr.mxu0 0.0
        %327 = vmatpush1.msra.mxu0 0.0
        %328 = vmatprep.subr.mxu0 0.0
        %329 = vmatpush1.msra.mxu0 0.0
        %330 = vmatprep.subr.mxu0 0.0
        %331 = vmatpush1.msra.mxu0 0.0
        %332 = vmatprep.subr.mxu0 0.0
        %333 = vmatpush1.msra.mxu0 0.0
        %334 = vmatprep.subr.mxu0 0.0
        %335 = vmatpush1.msra.mxu0 0.0
        %336 = vmatprep.subr.mxu0 0.0
        %337 = vmatpush1.msra.mxu0 0.0
        %338 = vmatprep.subr.mxu0 0.0
        %339 = vmatpush1.msra.mxu0 0.0
        %340 = vmatprep.subr.mxu0 0.0
        %341 = vmatpush1.msra.mxu0 0.0
        %342 = vmatprep.subr.mxu0 0.0
        %343 = vmatpush1.msra.mxu0 0.0
        %344 = vmatprep.subr.mxu0 0.0
        %345 = vmatpush1.msra.mxu0 0.0
        %346 = vmatprep.subr.mxu0 0.0
        %347 = vmatpush1.msra.mxu0 0.0
        %348 = vmatprep.subr.mxu0 0.0
        %349 = vmatpush1.msra.mxu0 0.0
        %350 = vmatprep.subr.mxu0 0.0
        %351 = vmatpush1.msra.mxu0 0.0
        %352 = vmatprep.subr.mxu0 0.0
        %353 = vmatpush1.msra.mxu0 0.0
        %354 = vmatprep.subr.mxu0 0.0
        %355 = vmatpush1.msra.mxu0 0.0
        %356 = vmatprep.subr.mxu0 0.0
        %357 = vmatpush1.msra.mxu0 %v310
        %358 = vmatprep.subr.mxu0 0.0
        %359 = vmatpush2.msra.mxu0 0.0
        %360 = vmatprep.subr.mxu0 0.0
        %361 = vmatpush2.msra.mxu0 0.0
        %362 = vmatprep.subr.mxu0 0.0
        %363 = vmatpush2.msra.mxu0 0.0
        %364 = vmatprep.subr.mxu0 0.0
        %365 = vmatpush2.msra.mxu0 0.0
        %366 = vmatprep.subr.mxu0 0.0
        %367 = vmatpush2.msra.mxu0 0.0
        %368 = vmatprep.subr.mxu0 0.0
        %369 = vmatpush2.msra.mxu0 0.0
        %370 = vmatprep.subr.mxu0 0.0
        %371 = vmatpush2.msra.mxu0 0.0
        %372 = vmatprep.subr.mxu0 0.0
        %373 = vmatpush2.msra.mxu0 0.0
        %374 = vmatprep.subr.mxu0 0.0
        %375 = vmatpush2.msra.mxu0 0.0
        %376 = vmatprep.subr.mxu0 0.0
        %377 = vmatpush2.msra.mxu0 0.0
        %378 = vmatprep.subr.mxu0 0.0
        %379 = vmatpush2.msra.mxu0 0.0
        %380 = vmatprep.subr.mxu0 0.0
        %381 = vmatpush2.msra.mxu0 0.0
        %382 = vmatprep.subr.mxu0 0.0
        %383 = vmatpush2.msra.mxu0 0.0
        %384 = vmatprep.subr.mxu0 0.0
        %385 = vmatpush2.msra.mxu0 0.0
        %386 = vmatprep.subr.mxu0 0.0
        %387 = vmatpush2.msra.mxu0 0.0
        %388 = vmatprep.subr.mxu0 0.0
        %389 = vmatpush2.msra.mxu0 0.0
        %390 = vmatprep.mubr.f32.mxu0 0.0
        %391 = vmatmul.mubr.f32.gmra.mxu0 %v324
        %v392 = vpop.f32.mrf.mxu0
        %v393 = vadd.f32 %v320, %v392
        %v394 = vpop.f32.mrf.mxu0
        %395 = vdwg.mxu0
        %v396 = vtanh.pop %v393
        %v397 = vstv %s295
        %v398 = vmul.f32 %v397, %v308
        %v399 = vsub.f32 %v303, %v398
        %v400 = vstv %s299
        %v401 = vmul.f32 %v399, %v400
        %v402 = vsub.f32 %v396, %v401
        %v403 = vmul.f32 %v402, %v402
        %v404 = vrot.slane %v403, 4
        %v405 = vadd.f32 %v403, %v404
        %v406 = vrot.slane %v405, 2
        %v407 = vadd.f32 %v405, %v406
        %v408 = vrot.slane %v407, 1
        %v409 = vadd.f32 %v407, %v408
        %410 = vst [vmem:[%s277] sm:$0x1] %v409
        %s411 = sand.u32 %s168, 1
        %s412 = scalar_lea.sflag [#allocation6], %s411
        %s413 = sand.u32 %s168, 1
        %s414 = scalar_lea.vmem [#allocation7], %s413
        // Predicated region
        $region45: #{tpu_custom_call.1} parent=39 // pred_check
          %p415 = pneg %p178
        $region46: #{tpu_custom_call.1} parent=39 // pred_check_branch
          %417 = sbr.rel (%p415) target = $region48
        $region47: #{tpu_custom_call.1} parent=39 // pred_region
          %s419 = ssub.s32 16, 16
          %420 = vsyncadd %s412, %s419
          %s421 = sadd.s32 %s32, %s31
          %s422 = smul.addr %s421, 16
          %s423 = scalar_lea.hbm %s6, %s422
          %s425 = sshll.u32 %s414, 4
          %s426 = int_to_ptr.vmem [resolvable:$true] %s425
          %428 = dma.vmem_to_hbm [thread:$0]  %s426, 16, %s423, %s412
        $region48: #{tpu_custom_call.1} parent=39 // pred_fallthru
          _
      $region40: #{tpu_custom_call.1} parent=5 // pred_fallthru
        _
      %p429 = scmp.le.s32.totalorder 2, %s22
      // Predicated region
      $region49: #{tpu_custom_call.1} parent=5 // pred_check
        %p430 = pneg %p429
      $region50: #{tpu_custom_call.1} parent=5 // pred_check_branch
        %432 = sbr.rel (%p430) target = $region52
      $region51: #{tpu_custom_call.1} parent=5 // pred_region
        %s433 = ssub.s32 %s22, 2
        // Predicated region
        $region53: #{tpu_custom_call.1} parent=51 // pred_check
          %p434 = pneg %p184
        $region54: #{tpu_custom_call.1} parent=51 // pred_check_branch
          %436 = sbr.rel (%p434) target = $region56
        $region55: #{tpu_custom_call.1} parent=51 // pred_region
          %s437 = sand.u32 %s169, 1
          %s438 = scalar_lea.sflag [#allocation6], %s437
          %s439 = sand.u32 %s169, 1
          %s440 = scalar_lea.vmem [#allocation7], %s439
          %441 = dma.done %s438, 16
        $region56: #{tpu_custom_call.1} parent=51 // pred_fallthru
          _
      $region52: #{tpu_custom_call.1} parent=5 // pred_fallthru
        _
    $region6: #{tpu_custom_call.1} parent=1 // loop_footer
      %s26 = sadd.s32 1, %s22
    $region7: #{tpu_custom_call.1} parent=1 // loop_footer_branch
      %21 = sbr.rel target = $region3
    $region8: #{tpu_custom_call.1} parent=1 // loop_exit
      _
    %442 = vsyncpa [#allocation5], 1
    %s443 = scalar_lea.sflag [#allocation5], 1
    %444 = vsyncpa %s443, 1
    %445 = vsyncpa [#allocation6], 1
    %s446 = scalar_lea.sflag [#allocation6], 1
    %447 = vsyncpa %s446, 1

</llo_original>
